<compile_context>
chip_gen: v7x
topology: tpu7x:2x2x1
jax: 0.10.0
libtpu: 0.0.40
codegen_flags: <defaults>
</compile_context>

<pallas_src>
import jax
import jax.numpy as jnp
from jax.experimental import pallas as pl
from jax.experimental.pallas import tpu as pltpu


_LANES = 128            # vreg lane width (fast, last dim)
_SUBLANES_I8 = 32       # native int8 tile is (32, 128)
_V5E_SCOPED_VMEM = 16 * 1024 * 1024  # smallest scoped-VMEM default across gens


def _round_up(x, m):
    return ((x + m - 1) // m) * m


def hnet_nonzero_kernel(x_ref, nz_ref):
    # Single mem-bound VPU compare; stored as an int8 0/1 mask.
    nz_ref[...] = (x_ref[...] > 0).astype(jnp.int8)


def _compiler_params(n_grid_axes, block_elems):
    # Double-buffered f32 input + int8 output = 2 * (4 + 1) B per block elem.
    needed = int(2 * 5 * block_elems * 1.25)  # 25% headroom
    kwargs = dict(dimension_semantics=("parallel",) * n_grid_axes)
    if needed > _V5E_SCOPED_VMEM:
        # v5e scoped default is 16 MiB (v6e/v7x: 32 MiB).  Raise only when the
        # pipeline actually needs it; physical VMEM is >= 64 MiB everywhere.
        kwargs["vmem_limit_bytes"] = needed
    return pltpu.CompilerParams(**kwargs)


def hnet_nonzero(x, tile_rows=8192):
    """x: (n_pts, n_nodes) float array.

    Returns:
      nz:           (n_pts, n_nodes) int8 mask, 1 iff x > 0
                    (NaN compares False, matching torch semantics).
      premerge_idx: (1, n_nodes**2) int32 constant, arange(n_nodes) tiled
                    n_nodes times.
    """
    n_pts, n_nodes = x.shape
    total = n_pts * n_nodes

    # -- premerge_idx: compile-time constant, built outside the kernel.
    premerge_idx = jax.lax.broadcasted_iota(
        jnp.int32, (n_nodes, n_nodes), 1
    ).reshape(1, n_nodes * n_nodes)
    # TODO(synk): numpy.matlib.repmat(arange) would be int64 on CPU; int32 kept
    # for TPU friendliness (values < n_nodes always fit).

    cost = pl.CostEstimate(flops=total, transcendentals=0,
                           bytes_accessed=5 * total)

    tile_rows = max(_SUBLANES_I8, _round_up(tile_rows, _SUBLANES_I8))

    # ---------- Fast path: x already lane-dense (n_nodes % 128 == 0). -------
    if n_nodes % _LANES == 0 and n_pts >= _SUBLANES_I8:
        budget_elems = tile_rows * _LANES  # same VMEM footprint as flat path
        if n_nodes >= budget_elems:
            tile_n = max(_LANES, (budget_elems // _LANES) * _LANES)
            tile_m = _SUBLANES_I8
        else:
            tile_n = n_nodes
            tile_m = min(
                (n_pts // _SUBLANES_I8) * _SUBLANES_I8,
                _round_up(max(_SUBLANES_I8, budget_elems // n_nodes),
                          _SUBLANES_I8),
            )
            # Keep >= 2 row blocks so v7x's two TensorCores both get work.
            if tile_m >= n_pts and n_pts >= 2 * _SUBLANES_I8:
                tile_m = _round_up((n_pts + 1) // 2, _SUBLANES_I8)

        grid = (pl.cdiv(n_pts, tile_m), pl.cdiv(n_nodes, tile_n))
        nz = pl.pallas_call(
            hnet_nonzero_kernel,
            out_shape=jax.ShapeDtypeStruct((n_pts, n_nodes), jnp.int8),
            grid=grid,
            in_specs=[pl.BlockSpec((tile_m, tile_n), lambda i, j: (i, j))],
            out_specs=pl.BlockSpec((tile_m, tile_n), lambda i, j: (i, j)),
            compiler_params=_compiler_params(2, tile_m * tile_n),
            cost_estimate=cost,
        )(x)
        return nz, premerge_idx

    # ---------- Flat path: repack to lane-dense (rows, 128). ----------------
    # Pad only to the 32-row int8-tile boundary (<= 4095 elems), never to a
    # multiple of tile_m; the ragged final grid block is masked by Pallas.
    rows = pl.cdiv(total, _LANES)
    rows32 = _round_up(rows, _SUBLANES_I8)
    padded_total = rows32 * _LANES

    x_flat = jnp.ravel(x)
    pad = padded_total - total
    if pad:
        x_flat = jnp.pad(x_flat, (0, pad))
    x2d = x_flat.reshape(rows32, _LANES)

    tile_m = min(tile_rows, rows32)
    if tile_m >= rows32 and rows32 >= 2 * _SUBLANES_I8:
        # Split the single block so v7x's two TensorCores both get work.
        tile_m = _round_up(rows32 // 2, _SUBLANES_I8)

    grid = (pl.cdiv(rows32, tile_m),)
    nz2d = pl.pallas_call(
        hnet_nonzero_kernel,
        out_shape=jax.ShapeDtypeStruct((rows32, _LANES), jnp.int8),
        grid=grid,
        in_specs=[pl.BlockSpec((tile_m, _LANES), lambda i: (i, 0))],
        out_specs=pl.BlockSpec((tile_m, _LANES), lambda i: (i, 0)),
        compiler_params=_compiler_params(1, tile_m * _LANES),
        cost_estimate=cost,
    )(x2d)

    if pad:
        nz = nz2d.reshape(padded_total)[:total].reshape(n_pts, n_nodes)
    else:
        nz = nz2d.reshape(n_pts, n_nodes)
    return nz, premerge_idx


if __name__ == "__main__":
    key = jax.random.PRNGKey(0)

    # Small shape consistent with the module (n_pts x n_nodes energies).
    n_pts, n_nodes = 16, 8
    x = jax.random.normal(key, (n_pts, n_nodes), dtype=jnp.float32)

    nz, premerge_idx = hnet_nonzero(x)
    jax.block_until_ready((nz, premerge_idx))

    # Reference check (plain JAX) for the semantics -- flat path.
    ref_nz = (x > 0).astype(jnp.int8)
    ref_idx = jnp.tile(jnp.arange(n_nodes, dtype=jnp.int32), (1, n_nodes))
    assert nz.shape == (n_pts, n_nodes) and nz.dtype == jnp.int8
    assert premerge_idx.shape == (1, n_nodes * n_nodes)
    assert bool(jnp.all(nz == ref_nz))
    assert bool(jnp.all(premerge_idx == ref_idx))

    # Also exercise the lane-dense fast path (n_nodes % 128 == 0).
    n_pts2, n_nodes2 = 96, 256
    x2 = jax.random.normal(jax.random.PRNGKey(1), (n_pts2, n_nodes2),
                           dtype=jnp.float32)
    nz2, idx2 = hnet_nonzero(x2)
    jax.block_until_ready((nz2, idx2))
    assert nz2.dtype == jnp.int8
    assert bool(jnp.all(nz2 == (x2 > 0).astype(jnp.int8)))
    assert idx2.shape == (1, n_nodes2 * n_nodes2)
    assert bool(jnp.all(
        idx2 == jnp.tile(jnp.arange(n_nodes2, dtype=jnp.int32), (1, n_nodes2))))

    print("KERNEL_OK")
</pallas_src>

<mosaic_0001>
module attributes {stable_mosaic.version = 11 : i64} {
  func.func @hnet_nonzero_kernel(%arg0: i32, %arg1: memref<32x128xf32, #tpu.memory_space<vmem>>, %arg2: memref<32x128xi8, #tpu.memory_space<vmem>>) attributes {dimension_semantics = [#tpu.dimension_semantics<parallel>], iteration_bounds = array<i64: 1>, scalar_prefetch = 0 : i64, scratch_operands = 0 : i64, tpu.core_type = #tpu.core_type<tc>, window_params = [{transform_indices = @transform_0, window_bounds = array<i64: 32, 128>}, {transform_indices = @transform_1, window_bounds = array<i64: 32, 128>}]} {
    %c0 = arith.constant 0 : index
    %c0_0 = arith.constant 0 : index
    %0 = vector.load %arg1[%c0, %c0_0] : memref<32x128xf32, #tpu.memory_space<vmem>>, vector<32x128xf32>
    %cst = arith.constant 0.000000e+00 : f32
    %1 = vector.broadcast %cst : f32 to vector<32x128xf32>
    %2 = arith.cmpf ogt, %0, %1 : vector<32x128xf32>
    %3 = arith.extui %2 : vector<32x128xi1> to vector<32x128xi8>
    %c0_1 = arith.constant 0 : index
    %c0_2 = arith.constant 0 : index
    %4 = vector.load %arg2[%c0_1, %c0_2] : memref<32x128xi8, #tpu.memory_space<vmem>>, vector<32x128xi8>
    tpu.vector_store %arg2[%c0_1, %c0_2], %3 {strides = array<i32>} : memref<32x128xi8, #tpu.memory_space<vmem>>, vector<32x128xi8>,
    return
  }
  func.func @transform_0(%arg0: i32) -> (i32, i32) {
    %c0_i32 = arith.constant 0 : i32
    %c0_i32_0 = arith.constant 0 : i32
    return %arg0, %c0_i32 : i32, i32
  }
  func.func @transform_1(%arg0: i32) -> (i32, i32) {
    %c0_i32 = arith.constant 0 : i32
    %c0_i32_0 = arith.constant 0 : i32
    return %arg0, %c0_i32 : i32, i32
  }
}

</mosaic_0001>

<llo_original>
// kernel: tpu_custom_call.1
$region0: #{tpu_custom_call.1}
  #allocation0 [shape = 'u32[]', space=smem, size = 0x4, offset = 0x4, fixed_abs, tag = 'smem constant byte address 0x4 - core index']
  #allocation1 [shape = 'u32[144,128]{1,0:T(1,128)}', space=vmem, size = 0x12000, scoped, tag = 'internal scratch']
  %s0 = inlined_call_operand.hbm [shape: f32[32,128], index: 0, kind: input, shape index: {}]
  %s1 = inlined_call_operand.hbm [shape: s8[32,128], index: 1, kind: output, shape index: {}]
  %s2 = sld [smem:[#allocation0]]
  $region18: #{tpu_custom_call.1} parent=0
    _
  %s4 = ssub.s32 1, %s2
  %s5 = scalar_select 0, %s4, %s2
  $region1: #{tpu_custom_call.1} parent=0
    #allocation2 [shape = 'u8[16384]{0}', space=vmem, size = 0x4000, scoped, tag = 'input window, operand 0, single buffered']
    #allocation3 [shape = 's32[1]{0}', space=sflag, size = 0x4, scoped, tag = 'scoped memory for tpu_custom_call.1']
    #allocation4 [shape = 's32[1]{0}', space=sflag, size = 0x4, scoped, tag = 'scoped memory for tpu_custom_call.1']
    #allocation5 [shape = 'u8[4096]{0}', space=vmem, size = 0x1000, scoped, tag = 'output window, operand 0, single buffered']
    %6 = vsyncpa [#allocation3], 0
    %7 = vsyncpa [#allocation4], 0
    // Predicated region
    $region2: #{tpu_custom_call.1} parent=1 // pred_check
      _
    $region3: #{tpu_custom_call.1} parent=1 // pred_check_branch
      %9 = sbr.rel (0) target = $region5
    $region4: #{tpu_custom_call.1} parent=1 // pred_region
      %s11 = ssub.s32 512, 512
      %12 = vsyncadd [#allocation3], %s11
      %s13 = sshll.u32 [#allocation2], 4
      %s14 = int_to_ptr.vmem [resolvable:$true] %s13
      %19 = dma.hbm_to_vmem [thread:$0]  %s0, 512, %s14, [#allocation3], 128, 128, 8
    $region5: #{tpu_custom_call.1} parent=1 // pred_fallthru
      _
    // Predicated region
    $region6: #{tpu_custom_call.1} parent=1 // pred_check
      _
    $region7: #{tpu_custom_call.1} parent=1 // pred_check_branch
      %21 = sbr.rel (0) target = $region9
    $region8: #{tpu_custom_call.1} parent=1 // pred_region
      %22 = dma.done [#allocation3], 512
    $region9: #{tpu_custom_call.1} parent=1 // pred_fallthru
      _
    %v25 = vld [vmem:[#allocation2] sm:$0xff]
    %v26 = vld [vmem:[#allocation2 + $0x8] sm:$0xff]
    %v27 = vld [vmem:[#allocation2 + $0x10] sm:$0xff]
    %v28 = vld [vmem:[#allocation2 + $0x18] sm:$0xff]
    %vm29 = vcmp.gt.f32.partialorder %v25, 0.0
    %vm30 = vcmp.gt.f32.partialorder %v26, 0.0
    %vm31 = vcmp.gt.f32.partialorder %v27, 0.0
    %vm32 = vcmp.gt.f32.partialorder %v28, 0.0
    %vm33 = vmpackc.low %vm30, %vm29
    %vm34 = vmpackc.low %vm32, %vm31
    %vm35 = vmpackc.even %vm34, %vm33
    %v36 = vsel %vm35, 16843009, 0
    %37 = vst [vmem:[#allocation5] sm:$0xff] %v36
    // Predicated region
    $region10: #{tpu_custom_call.1} parent=1 // pred_check
      _
    $region11: #{tpu_custom_call.1} parent=1 // pred_check_branch
      %39 = sbr.rel (0) target = $region13
    $region12: #{tpu_custom_call.1} parent=1 // pred_region
      %s41 = ssub.s32 128, 128
      %42 = vsyncadd [#allocation4], %s41
      %s44 = sshll.u32 [#allocation5], 4
      %s45 = int_to_ptr.vmem [resolvable:$true] %s44
      %47 = dma.vmem_to_hbm [thread:$0]  %s45, 128, %s1, [#allocation4]
    $region13: #{tpu_custom_call.1} parent=1 // pred_fallthru
      _
    // Predicated region
    $region14: #{tpu_custom_call.1} parent=1 // pred_check
      _
    $region15: #{tpu_custom_call.1} parent=1 // pred_check_branch
      %49 = sbr.rel (0) target = $region17
    $region16: #{tpu_custom_call.1} parent=1 // pred_region
      %50 = dma.done [#allocation4], 128
    $region17: #{tpu_custom_call.1} parent=1 // pred_fallthru
      _
    %51 = vsyncpa [#allocation3], 1
    %52 = vsyncpa [#allocation4], 1

</llo_original>
